<compile_context>
chip_gen: v7x
topology: tpu7x:2x2x1
jax: 0.10.0
libtpu: 0.0.40
codegen_flags: <defaults>
</compile_context>

<pallas_src>
import math
import functools

import jax
import jax.numpy as jnp
from jax.experimental import pallas as pl
from jax.experimental.pallas import tpu as pltpu

# Scaled-down Llama3-8B attention constants (same structure as the module, smaller sizes).
DIM = 256
N_HEADS = 8
HEAD_DIM = DIM // N_HEADS               # 32
N_KV_HEADS = 2
N_KV_HEAD_REP = N_HEADS // N_KV_HEADS   # 4
MAX_BATCH_SIZE = 4
MAX_SEQ_LEN = 16
ROPE_THETA = 500000.0

Q_OUT = N_HEADS * HEAD_DIM              # 256
KV_OUT = N_KV_HEADS * HEAD_DIM          # 64
QKV_OUT = Q_OUT + 2 * KV_OUT            # 384

assert HEAD_DIM % 2 == 0, "interleaved RoPE rotation requires an even head dim"

_MASK_VALUE = float(jnp.finfo(jnp.float32).min) / 2.0   # finite large-negative (f32 safe)


# ----------------------- kernel 1: fused QKV projection + RoPE -----------------------

def _qkv_rope_kernel(x_ref, w_ref, cos_ref, sin_e_ref, sin_o_ref, q_ref, k_ref, v_ref):
    # x: (M, DIM) f32; w: (DIM, QKV_OUT) bf16; cos/sin tables: (M, QKV_OUT) f32.
    qkv = jnp.dot(x_ref[...].astype(jnp.bfloat16), w_ref[...],
                  preferred_element_type=jnp.float32)              # (M, QKV_OUT) f32
    width = qkv.shape[-1]
    # Interleaved complex rotation with parity-masked sin tables (no iota/select):
    #   out[2i]   = x[2i]*cos - x[2i+1]*sin   (sin_e = -sin at even lanes, 0 at odd)
    #   out[2i+1] = x[2i+1]*cos + x[2i]*sin   (sin_o = +sin at odd lanes, 0 at even)
    # Lane rolls are full-width: cross-head / cross-section leakage is zeroed by the masks.
    rot = (qkv * cos_ref[...]
           + pltpu.roll(qkv, shift=width - 1, axis=1) * sin_e_ref[...]   # x[j+1]
           + pltpu.roll(qkv, shift=1, axis=1) * sin_o_ref[...])          # x[j-1]
    q_ref[...] = rot[:, :Q_OUT].astype(q_ref.dtype)
    k_ref[...] = rot[:, Q_OUT:Q_OUT + KV_OUT].astype(k_ref.dtype)
    v_ref[...] = qkv[:, Q_OUT + KV_OUT:].astype(v_ref.dtype)             # no RoPE on V


def qkv_rope(x2d, w_qkv, cos_t, sin_e_t, sin_o_t):
    """x2d: (M, DIM); w_qkv: (DIM, QKV_OUT) -> q (M, Q_OUT), k (M, KV_OUT), v (M, KV_OUT)."""
    M = x2d.shape[0]
    return pl.pallas_call(
        _qkv_rope_kernel,
        out_shape=(jax.ShapeDtypeStruct((M, Q_OUT), jnp.float32),
                   jax.ShapeDtypeStruct((M, KV_OUT), jnp.float32),
                   jax.ShapeDtypeStruct((M, KV_OUT), jnp.float32)),
        grid=(1,),
        in_specs=[pl.BlockSpec((M, DIM), lambda i: (0, 0)),
                  pl.BlockSpec((DIM, QKV_OUT), lambda i: (0, 0)),
                  pl.BlockSpec((M, QKV_OUT), lambda i: (0, 0)),
                  pl.BlockSpec((M, QKV_OUT), lambda i: (0, 0)),
                  pl.BlockSpec((M, QKV_OUT), lambda i: (0, 0))],
        out_specs=(pl.BlockSpec((M, Q_OUT), lambda i: (0, 0)),
                   pl.BlockSpec((M, KV_OUT), lambda i: (0, 0)),
                   pl.BlockSpec((M, KV_OUT), lambda i: (0, 0))),
    )(x2d, w_qkv, cos_t, sin_e_t, sin_o_t)


# --------------- kernel 2: fused grouped-query attention + output projection ---------------

def _attn_wo_kernel(sp_ref, q_ref, k_ref, v_ref, wo_ref, o_ref, acc_ref, *, scale, rep):
    g = pl.program_id(1)

    @pl.when(g == 0)
    def _():
        acc_ref[...] = jnp.zeros_like(acc_ref)

    sq = q_ref.shape[0]                                   # 8
    skv, d = k_ref.shape                                  # (Skv, 32)
    k = k_ref[...].astype(jnp.bfloat16)
    v = v_ref[...].astype(jnp.bfloat16)

    # Stack this KV group's `rep` query heads along sublanes: rows r = h*Sq + s.
    q = jnp.concatenate([q_ref[:, h * d:(h + 1) * d] for h in range(rep)],
                        axis=0).astype(jnp.bfloat16)      # (rep*Sq, D) = (32, 32)

    # One 32-row scores matmul; contract last axes so no explicit K transpose is emitted.
    scores = jax.lax.dot_general(q, k, (((1,), (1,)), ((), ())),
                                 preferred_element_type=jnp.float32) * scale   # (32, Skv)

    # Causal mask built in-kernel from the scalar-prefetched start_pos (no mask DMA).
    row = jax.lax.broadcasted_iota(jnp.int32, scores.shape, 0)
    col = jax.lax.broadcasted_iota(jnp.int32, scores.shape, 1)
    qpos = sp_ref[0] + row % sq                           # query abs position = start + s
    scores = jnp.where(col <= qpos, scores, _MASK_VALUE)

    # Softmax in f32; denominator reciprocal on the EUP slot.
    mx = jnp.max(scores, axis=-1, keepdims=True)
    p = jnp.exp(scores - mx)
    p = p * pl.reciprocal(jnp.sum(p, axis=-1, keepdims=True), approx=True)

    attn = jax.lax.dot_general(p.astype(jnp.bfloat16), v, (((1,), (0,)), ((), ())),
                               preferred_element_type=jnp.float32)    # (rep*Sq, D) f32

    # Fused output projection: fold each head of this KV group into its Wo row block
    # and accumulate into the lane-dense (Sq, DIM) per-batch accumulator.
    for h in range(rep):
        attn_h = attn[h * sq:(h + 1) * sq, :]                         # (Sq, D)
        acc_ref[...] += jnp.dot(attn_h.astype(jnp.bfloat16),
                                wo_ref[h * d:(h + 1) * d, :],
                                preferred_element_type=jnp.float32)

    @pl.when(g == pl.num_programs(1) - 1)
    def _():
        o_ref[...] = acc_ref[...].astype(o_ref.dtype)


def attention_core(start_pos_arr, q, keys, vals, wo_t):
    """q: (B, Sq, H*D); keys/vals: (B, KVH, Skv, D); wo_t: (H*D, DIM) -> (B, Sq, DIM)."""
    B, Sq, _ = q.shape
    _, KVH, Skv, D = keys.shape
    rep = N_KV_HEAD_REP
    kern = functools.partial(_attn_wo_kernel, scale=1.0 / math.sqrt(D), rep=rep)
    return pl.pallas_call(
        kern,
        out_shape=jax.ShapeDtypeStruct((B, Sq, DIM), jnp.float32),
        grid_spec=pltpu.PrefetchScalarGridSpec(
            num_scalar_prefetch=1,
            grid=(B, KVH),
            in_specs=[
                # q: pick this group's rep heads as a 128-lane slab (no transpose).
                pl.BlockSpec((None, Sq, rep * D), lambda b, g, sp: (b, 0, g)),
                # K/V: GQA "repeat_kv" expressed purely through the index_map.
                pl.BlockSpec((None, None, Skv, D), lambda b, g, sp: (b, g, 0, 0)),
                pl.BlockSpec((None, None, Skv, D), lambda b, g, sp: (b, g, 0, 0)),
                # Wo rows belonging to this group's heads.
                pl.BlockSpec((rep * D, DIM), lambda b, g, sp: (g, 0)),
            ],
            out_specs=pl.BlockSpec((None, Sq, DIM), lambda b, g, sp: (b, 0, 0)),
            scratch_shapes=[pltpu.VMEM((Sq, DIM), jnp.float32)],
        ),
        compiler_params=pltpu.CompilerParams(
            dimension_semantics=("parallel", "arbitrary")),
    )(start_pos_arr, q, keys, vals, wo_t)


# ----------------------------- RoPE table precompute -----------------------------

def build_rope_tables(start_pos, seqlen, bsz):
    """Parity-masked interleaved RoPE tables widened to the fused [Q|K|V] column layout
    (V columns get identity rotation: cos=1, sin=0).  Shapes: (bsz*seqlen, QKV_OUT)."""
    inv = 1.0 / (ROPE_THETA ** (jnp.arange(0, HEAD_DIM, 2, dtype=jnp.float32) / HEAD_DIM))
    t = jnp.arange(start_pos, start_pos + seqlen, dtype=jnp.float32)
    ang = jnp.outer(t, inv)                                   # (S, D/2)
    cos_d = jnp.repeat(jnp.cos(ang), 2, axis=-1)              # (S, D) per-pair repeated
    sin_d = jnp.repeat(jnp.sin(ang), 2, axis=-1)
    parity = jnp.arange(HEAD_DIM) % 2
    sin_e_d = jnp.where(parity == 0, -sin_d, 0.0)             # -sin at even lanes, 0 at odd
    sin_o_d = jnp.where(parity == 1, sin_d, 0.0)              # +sin at odd lanes, 0 at even

    cos_t = jnp.concatenate([jnp.tile(cos_d, (1, N_HEADS)),
                             jnp.tile(cos_d, (1, N_KV_HEADS)),
                             jnp.ones((seqlen, KV_OUT), jnp.float32)], axis=-1)
    sin_e_t = jnp.concatenate([jnp.tile(sin_e_d, (1, N_HEADS)),
                               jnp.tile(sin_e_d, (1, N_KV_HEADS)),
                               jnp.zeros((seqlen, KV_OUT), jnp.float32)], axis=-1)
    sin_o_t = jnp.concatenate([jnp.tile(sin_o_d, (1, N_HEADS)),
                               jnp.tile(sin_o_d, (1, N_KV_HEADS)),
                               jnp.zeros((seqlen, KV_OUT), jnp.float32)], axis=-1)
    # Tile rows per batch to match the (bsz*seqlen, QKV_OUT) activation layout.
    return (jnp.tile(cos_t, (bsz, 1)), jnp.tile(sin_e_t, (bsz, 1)), jnp.tile(sin_o_t, (bsz, 1)))


# ----------------------------- forward pass -----------------------------

def attention_forward(x, start_pos, rope_tables, params, cache_k, cache_v):
    w_qkv, wo_t = params
    cos_t, sin_e_t, sin_o_t = rope_tables
    bsz, seqlen, _ = x.shape
    skv = start_pos + seqlen

    x2d = x.reshape(bsz * seqlen, DIM)
    q2d, k2d, v2d = qkv_rope(x2d, w_qkv, cos_t, sin_e_t, sin_o_t)

    # KV-cache writeback (data-movement glue in plain JAX).  Cache layout is (B, KVH, S, D)
    # so the attention kernel reads it transpose-free; only the tiny new K/V is transposed.
    # TODO(synk): do the writeback in-place with a Pallas kernel + input_output_aliases.
    k_new = k2d.reshape(bsz, seqlen, N_KV_HEADS, HEAD_DIM).transpose(0, 2, 1, 3)
    v_new = v2d.reshape(bsz, seqlen, N_KV_HEADS, HEAD_DIM).transpose(0, 2, 1, 3)
    cache_k = jax.lax.dynamic_update_slice(cache_k, k_new, (0, 0, start_pos, 0))
    cache_v = jax.lax.dynamic_update_slice(cache_v, v_new, (0, 0, start_pos, 0))
    keys = cache_k[:bsz, :, :skv]      # (B, KVH, Skv, D)
    vals = cache_v[:bsz, :, :skv]

    q = q2d.reshape(bsz, seqlen, Q_OUT)                       # (B, Sq, H*D) - no transpose
    start_arr = jnp.array([start_pos], dtype=jnp.int32)
    out = attention_core(start_arr, q, keys, vals, wo_t)      # fused SDPA + Wo -> (B, Sq, DIM)
    return out, cache_k, cache_v


if __name__ == "__main__":
    key = jax.random.PRNGKey(0)
    kx, kq, kk, kv, ko = jax.random.split(key, 5)

    bsz, seqlen, start_pos = 2, 8, 4

    x = jax.random.normal(kx, (bsz, seqlen, DIM), dtype=jnp.float32)

    # nn.Linear weights are (out, in); store transposed (in, out), bf16 for the MXU.
    wq_t = (0.02 * jax.random.normal(kq, (DIM, Q_OUT))).astype(jnp.bfloat16)
    wk_t = (0.02 * jax.random.normal(kk, (DIM, KV_OUT))).astype(jnp.bfloat16)
    wv_t = (0.02 * jax.random.normal(kv, (DIM, KV_OUT))).astype(jnp.bfloat16)
    wo_t = (0.02 * jax.random.normal(ko, (Q_OUT, DIM))).astype(jnp.bfloat16)
    w_qkv = jnp.concatenate([wq_t, wk_t, wv_t], axis=1)       # (DIM, QKV_OUT)

    # KV cache stored (B, KVH, S, D) so the attention kernel reads it without transposes.
    cache_k = jnp.zeros((MAX_BATCH_SIZE, N_KV_HEADS, MAX_SEQ_LEN, HEAD_DIM), jnp.float32)
    cache_v = jnp.zeros((MAX_BATCH_SIZE, N_KV_HEADS, MAX_SEQ_LEN, HEAD_DIM), jnp.float32)

    rope_tables = build_rope_tables(start_pos, seqlen, bsz)   # one-time host precompute

    out, cache_k, cache_v = attention_forward(
        x, start_pos, rope_tables, (w_qkv, wo_t), cache_k, cache_v)

    jax.block_until_ready(out)
    assert out.shape == (bsz, seqlen, DIM)
    print("KERNEL_OK")
</pallas_src>

<mosaic_0001>
module attributes {stable_mosaic.version = 11 : i64} {
  func.func @_qkv_rope_kernel(%arg0: i32, %arg1: memref<16x256xf32, #tpu.memory_space<vmem>>, %arg2: memref<256x384xbf16, #tpu.memory_space<vmem>>, %arg3: memref<16x384xf32, #tpu.memory_space<vmem>>, %arg4: memref<16x384xf32, #tpu.memory_space<vmem>>, %arg5: memref<16x384xf32, #tpu.memory_space<vmem>>, %arg6: memref<16x256xf32, #tpu.memory_space<vmem>>, %arg7: memref<16x64xf32, #tpu.memory_space<vmem>>, %arg8: memref<16x64xf32, #tpu.memory_space<vmem>>) attributes {dimension_semantics = [#tpu.dimension_semantics<arbitrary>], iteration_bounds = array<i64: 1>, scalar_prefetch = 0 : i64, scratch_operands = 0 : i64, tpu.core_type = #tpu.core_type<tc>, window_params = [{pipeline_mode = #tpu.pipeline_mode<synchronous>, transform_indices = @transform_0, window_bounds = array<i64: 16, 256>}, {pipeline_mode = #tpu.pipeline_mode<synchronous>, transform_indices = @transform_1, window_bounds = array<i64: 256, 384>}, {pipeline_mode = #tpu.pipeline_mode<synchronous>, transform_indices = @transform_2, window_bounds = array<i64: 16, 384>}, {pipeline_mode = #tpu.pipeline_mode<synchronous>, transform_indices = @transform_3, window_bounds = array<i64: 16, 384>}, {pipeline_mode = #tpu.pipeline_mode<synchronous>, transform_indices = @transform_4, window_bounds = array<i64: 16, 384>}, {pipeline_mode = #tpu.pipeline_mode<synchronous>, transform_indices = @transform_5, window_bounds = array<i64: 16, 256>}, {pipeline_mode = #tpu.pipeline_mode<synchronous>, transform_indices = @transform_6, window_bounds = array<i64: 16, 64>}, {pipeline_mode = #tpu.pipeline_mode<synchronous>, transform_indices = @transform_7, window_bounds = array<i64: 16, 64>}]} {
    %c0 = arith.constant 0 : index
    %c0_0 = arith.constant 0 : index
    %0 = vector.load %arg1[%c0, %c0_0] : memref<16x256xf32, #tpu.memory_space<vmem>>, vector<16x256xf32>
    %1 = arith.truncf %0 : vector<16x256xf32> to vector<16x256xbf16>
    %c0_1 = arith.constant 0 : index
    %c0_2 = arith.constant 0 : index
    %2 = vector.load %arg2[%c0_1, %c0_2] : memref<256x384xbf16, #tpu.memory_space<vmem>>, vector<256x384xbf16>
    %cst = arith.constant dense<0.000000e+00> : vector<16x384xf32>
    %3 = tpu.matmul %1, %2, %cst {dimension_numbers = #tpu.dot_dimension_numbers<[1], [0], [0], [1], [0, 0, 1, 1], [], []>} : vector<16x256xbf16>, vector<256x384xbf16>, vector<16x384xf32> -> vector<16x384xf32>
    %c0_3 = arith.constant 0 : index
    %c0_4 = arith.constant 0 : index
    %4 = vector.load %arg3[%c0_3, %c0_4] : memref<16x384xf32, #tpu.memory_space<vmem>>, vector<16x384xf32>
    %5 = arith.mulf %3, %4 : vector<16x384xf32>
    %c383_i32 = arith.constant 383 : i32
    %6 = tpu.dynamic_rotate %3 by %c383_i32 dim 1 : vector<16x384xf32>, i32 -> vector<16x384xf32>
    %c0_5 = arith.constant 0 : index
    %c0_6 = arith.constant 0 : index
    %7 = vector.load %arg4[%c0_5, %c0_6] : memref<16x384xf32, #tpu.memory_space<vmem>>, vector<16x384xf32>
    %8 = arith.mulf %6, %7 : vector<16x384xf32>
    %9 = arith.addf %5, %8 : vector<16x384xf32>
    %c1_i32 = arith.constant 1 : i32
    %10 = tpu.dynamic_rotate %3 by %c1_i32 dim 1 : vector<16x384xf32>, i32 -> vector<16x384xf32>
    %c0_7 = arith.constant 0 : index
    %c0_8 = arith.constant 0 : index
    %11 = vector.load %arg5[%c0_7, %c0_8] : memref<16x384xf32, #tpu.memory_space<vmem>>, vector<16x384xf32>
    %12 = arith.mulf %10, %11 : vector<16x384xf32>
    %13 = arith.addf %9, %12 : vector<16x384xf32>
    %14 = vector.extract_strided_slice %13 {offsets = [0, 0], sizes = [16, 256], strides = [1, 1]} : vector<16x384xf32> to vector<16x256xf32>
    %c0_9 = arith.constant 0 : index
    %c0_10 = arith.constant 0 : index
    %15 = vector.load %arg6[%c0_9, %c0_10] : memref<16x256xf32, #tpu.memory_space<vmem>>, vector<16x256xf32>
    tpu.vector_store %arg6[%c0_9, %c0_10], %14 {strides = array<i32>} : memref<16x256xf32, #tpu.memory_space<vmem>>, vector<16x256xf32>,
    %16 = vector.extract_strided_slice %13 {offsets = [0, 256], sizes = [16, 64], strides = [1, 1]} : vector<16x384xf32> to vector<16x64xf32>
    %c0_11 = arith.constant 0 : index
    %c0_12 = arith.constant 0 : index
    %17 = vector.load %arg7[%c0_11, %c0_12] : memref<16x64xf32, #tpu.memory_space<vmem>>, vector<16x64xf32>
    tpu.vector_store %arg7[%c0_11, %c0_12], %16 {strides = array<i32>} : memref<16x64xf32, #tpu.memory_space<vmem>>, vector<16x64xf32>,
    %18 = vector.extract_strided_slice %3 {offsets = [0, 320], sizes = [16, 64], strides = [1, 1]} : vector<16x384xf32> to vector<16x64xf32>
    %c0_13 = arith.constant 0 : index
    %c0_14 = arith.constant 0 : index
    %19 = vector.load %arg8[%c0_13, %c0_14] : memref<16x64xf32, #tpu.memory_space<vmem>>, vector<16x64xf32>
    tpu.vector_store %arg8[%c0_13, %c0_14], %18 {strides = array<i32>} : memref<16x64xf32, #tpu.memory_space<vmem>>, vector<16x64xf32>,
    return
  }
  func.func @transform_0(%arg0: i32) -> (i32, i32) {
    %c0_i32 = arith.constant 0 : i32
    %c0_i32_0 = arith.constant 0 : i32
    %c0_i32_1 = arith.constant 0 : i32
    return %c0_i32, %c0_i32_0 : i32, i32
  }
  func.func @transform_1(%arg0: i32) -> (i32, i32) {
    %c0_i32 = arith.constant 0 : i32
    %c0_i32_0 = arith.constant 0 : i32
    %c0_i32_1 = arith.constant 0 : i32
    return %c0_i32, %c0_i32_0 : i32, i32
  }
  func.func @transform_2(%arg0: i32) -> (i32, i32) {
    %c0_i32 = arith.constant 0 : i32
    %c0_i32_0 = arith.constant 0 : i32
    %c0_i32_1 = arith.constant 0 : i32
    return %c0_i32, %c0_i32_0 : i32, i32
  }
  func.func @transform_3(%arg0: i32) -> (i32, i32) {
    %c0_i32 = arith.constant 0 : i32
    %c0_i32_0 = arith.constant 0 : i32
    %c0_i32_1 = arith.constant 0 : i32
    return %c0_i32, %c0_i32_0 : i32, i32
  }
  func.func @transform_4(%arg0: i32) -> (i32, i32) {
    %c0_i32 = arith.constant 0 : i32
    %c0_i32_0 = arith.constant 0 : i32
    %c0_i32_1 = arith.constant 0 : i32
    return %c0_i32, %c0_i32_0 : i32, i32
  }
  func.func @transform_5(%arg0: i32) -> (i32, i32) {
    %c0_i32 = arith.constant 0 : i32
    %c0_i32_0 = arith.constant 0 : i32
    %c0_i32_1 = arith.constant 0 : i32
    return %c0_i32, %c0_i32_0 : i32, i32
  }
  func.func @transform_6(%arg0: i32) -> (i32, i32) {
    %c0_i32 = arith.constant 0 : i32
    %c0_i32_0 = arith.constant 0 : i32
    %c0_i32_1 = arith.constant 0 : i32
    return %c0_i32, %c0_i32_0 : i32, i32
  }
  func.func @transform_7(%arg0: i32) -> (i32, i32) {
    %c0_i32 = arith.constant 0 : i32
    %c0_i32_0 = arith.constant 0 : i32
    %c0_i32_1 = arith.constant 0 : i32
    return %c0_i32, %c0_i32_0 : i32, i32
  }
}

</mosaic_0001>

<llo_original>
// kernel: tpu_custom_call.1
$region0: #{tpu_custom_call.1}
  #allocation0 [shape = 'u32[]', space=smem, size = 0x4, offset = 0x4, fixed_abs, tag = 'smem constant byte address 0x4 - core index']
  #allocation1 [shape = 'u32[144,128]{1,0:T(1,128)}', space=vmem, size = 0x12000, scoped, tag = 'internal scratch']
  %s0 = inlined_call_operand.hbm [shape: f32[16,256], index: 0, kind: input, shape index: {}]
  %s1 = inlined_call_operand.hbm [shape: bf16[256,384], index: 1, kind: input, shape index: {}]
  %s2 = inlined_call_operand.hbm [shape: f32[16,384], index: 2, kind: input, shape index: {}]
  %s3 = inlined_call_operand.hbm [shape: f32[16,384], index: 3, kind: input, shape index: {}]
  %s4 = inlined_call_operand.hbm [shape: f32[16,384], index: 4, kind: input, shape index: {}]
  %s5 = inlined_call_operand.hbm [shape: f32[16,256], index: 5, kind: output, shape index: {0}]
  %s6 = inlined_call_operand.hbm [shape: f32[16,64], index: 6, kind: output, shape index: {1}]
  %s7 = inlined_call_operand.hbm [shape: f32[16,64], index: 7, kind: output, shape index: {2}]
  %8 = xla_tuple %s5, %s6, %s7
  %s9 = sld [smem:[#allocation0]]
  $region66: #{tpu_custom_call.1} parent=0
    _
  %s11 = ssub.s32 1, %s9
  %s12 = scalar_select 0, %s11, %s9
  $region1: #{tpu_custom_call.1} parent=0
    #allocation2 [shape = 'u8[16384]{0}', space=vmem, size = 0x4000, scoped, tag = 'input window, operand 0, single buffered']
    #allocation3 [shape = 's32[1]{0}', space=sflag, size = 0x4, scoped, tag = 'scoped memory for tpu_custom_call.1']
    #allocation4 [shape = 's32[1]{0}', space=sflag, size = 0x4, scoped, tag = 'scoped memory for tpu_custom_call.1']
    #allocation5 [shape = 'u8[196608]{0}', space=vmem, size = 0x30000, scoped, tag = 'input window, operand 1, single buffered']
    #allocation6 [shape = 's32[1]{0}', space=sflag, size = 0x4, scoped, tag = 'scoped memory for tpu_custom_call.1']
    #allocation7 [shape = 'u8[24576]{0}', space=vmem, size = 0x6000, scoped, tag = 'input window, operand 2, single buffered']
    #allocation8 [shape = 'u8[24576]{0}', space=vmem, size = 0x6000, scoped, tag = 'input window, operand 3, single buffered']
    #allocation9 [shape = 's32[1]{0}', space=sflag, size = 0x4, scoped, tag = 'scoped memory for tpu_custom_call.1']
    #allocation10 [shape = 'u8[24576]{0}', space=vmem, size = 0x6000, scoped, tag = 'input window, operand 4, single buffered']
    #allocation11 [shape = 'u8[16384]{0}', space=vmem, size = 0x4000, scoped, tag = 'output window, operand 0, single buffered']
    #allocation12 [shape = 'u8[8192]{0}', space=vmem, size = 0x2000, scoped, tag = 'output window, operand 1, single buffered']
    #allocation13 [shape = 's32[1]{0}', space=sflag, size = 0x4, scoped, tag = 'scoped memory for tpu_custom_call.1']
    #allocation14 [shape = 'u8[8192]{0}', space=vmem, size = 0x2000, scoped, tag = 'output window, operand 2, single buffered']
    %13 = vsyncpa [#allocation3], 0
    %14 = vsyncpa [#allocation6], 0
    %15 = vsyncpa [#allocation9], 0
    %16 = vsyncpa [#allocation4], 0
    %17 = vsyncpa [#allocation13], 0
    // Predicated region
    $region2: #{tpu_custom_call.1} parent=1 // pred_check
      _
    $region3: #{tpu_custom_call.1} parent=1 // pred_check_branch
      %19 = sbr.rel (0) target = $region5
    $region4: #{tpu_custom_call.1} parent=1 // pred_region
      %s21 = ssub.s32 512, 512
      %22 = vsyncadd [#allocation3], %s21
      %s23 = sshll.u32 [#allocation2], 4
      %s24 = int_to_ptr.vmem [resolvable:$true] %s23
      %29 = dma.hbm_to_vmem [thread:$0]  %s0, 512, %s24, [#allocation3], 256, 256, 16
    $region5: #{tpu_custom_call.1} parent=1 // pred_fallthru
      _
    // Predicated region
    $region6: #{tpu_custom_call.1} parent=1 // pred_check
      _
    $region7: #{tpu_custom_call.1} parent=1 // pred_check_branch
      %31 = sbr.rel (0) target = $region9
    $region8: #{tpu_custom_call.1} parent=1 // pred_region
      %s33 = ssub.s32 6144, 6144
      %34 = vsyncadd [#allocation6], %s33
      %s35 = sshll.u32 [#allocation5], 4
      %s36 = int_to_ptr.vmem [resolvable:$true] %s35
      %41 = dma.hbm_to_vmem [thread:$0]  %s1, 6144, %s36, [#allocation6], 192, 192, 12
    $region9: #{tpu_custom_call.1} parent=1 // pred_fallthru
      _
    // Predicated region
    $region10: #{tpu_custom_call.1} parent=1 // pred_check
      _
    $region11: #{tpu_custom_call.1} parent=1 // pred_check_branch
      %43 = sbr.rel (0) target = $region13
    $region12: #{tpu_custom_call.1} parent=1 // pred_region
      %s45 = ssub.s32 768, 768
      %46 = vsyncadd [#allocation6], %s45
      %s47 = sshll.u32 [#allocation7], 4
      %s48 = int_to_ptr.vmem [resolvable:$true] %s47
      %53 = dma.hbm_to_vmem [thread:$0]  %s2, 768, %s48, [#allocation6], 384, 384, 24
    $region13: #{tpu_custom_call.1} parent=1 // pred_fallthru
      _
    // Predicated region
    $region14: #{tpu_custom_call.1} parent=1 // pred_check
      _
    $region15: #{tpu_custom_call.1} parent=1 // pred_check_branch
      %55 = sbr.rel (0) target = $region17
    $region16: #{tpu_custom_call.1} parent=1 // pred_region
      %s57 = ssub.s32 768, 768
      %58 = vsyncadd [#allocation9], %s57
      %s59 = sshll.u32 [#allocation8], 4
      %s60 = int_to_ptr.vmem [resolvable:$true] %s59
      %65 = dma.hbm_to_vmem [thread:$0]  %s3, 768, %s60, [#allocation9], 384, 384, 24
    $region17: #{tpu_custom_call.1} parent=1 // pred_fallthru
      _
    // Predicated region
    $region18: #{tpu_custom_call.1} parent=1 // pred_check
      _
    $region19: #{tpu_custom_call.1} parent=1 // pred_check_branch
      %67 = sbr.rel (0) target = $region21
    $region20: #{tpu_custom_call.1} parent=1 // pred_region
      %s69 = ssub.s32 768, 768
      %70 = vsyncadd [#allocation9], %s69
      %s71 = sshll.u32 [#allocation10], 4
      %s72 = int_to_ptr.vmem [resolvable:$true] %s71
      %77 = dma.hbm_to_vmem [thread:$0]  %s4, 768, %s72, [#allocation9], 384, 384, 24
    $region21: #{tpu_custom_call.1} parent=1 // pred_fallthru
      _
    // Predicated region
    $region22: #{tpu_custom_call.1} parent=1 // pred_check
      _
    $region23: #{tpu_custom_call.1} parent=1 // pred_check_branch
      %79 = sbr.rel (0) target = $region25
    $region24: #{tpu_custom_call.1} parent=1 // pred_region
      %80 = dma.done [#allocation3], 512
    $region25: #{tpu_custom_call.1} parent=1 // pred_fallthru
      _
    // Predicated region
    $region26: #{tpu_custom_call.1} parent=1 // pred_check
      _
    $region27: #{tpu_custom_call.1} parent=1 // pred_check_branch
      %82 = sbr.rel (0) target = $region29
    $region28: #{tpu_custom_call.1} parent=1 // pred_region
      %83 = dma.done [#allocation6], 6144
    $region29: #{tpu_custom_call.1} parent=1 // pred_fallthru
      _
    // Predicated region
    $region30: #{tpu_custom_call.1} parent=1 // pred_check
      _
    $region31: #{tpu_custom_call.1} parent=1 // pred_check_branch
      %85 = sbr.rel (0) target = $region33
    $region32: #{tpu_custom_call.1} parent=1 // pred_region
      %86 = dma.done [#allocation6], 768
    $region33: #{tpu_custom_call.1} parent=1 // pred_fallthru
      _
    // Predicated region
    $region34: #{tpu_custom_call.1} parent=1 // pred_check
      _
    $region35: #{tpu_custom_call.1} parent=1 // pred_check_branch
      %88 = sbr.rel (0) target = $region37
    $region36: #{tpu_custom_call.1} parent=1 // pred_region
      %89 = dma.done [#allocation9], 768
    $region37: #{tpu_custom_call.1} parent=1 // pred_fallthru
      _
    // Predicated region
    $region38: #{tpu_custom_call.1} parent=1 // pred_check
      _
    $region39: #{tpu_custom_call.1} parent=1 // pred_check_branch
      %91 = sbr.rel (0) target = $region41
    $region40: #{tpu_custom_call.1} parent=1 // pred_region
      %92 = dma.done [#allocation9], 768
    $region41: #{tpu_custom_call.1} parent=1 // pred_fallthru
      _
    %v94 = vld [vmem:[#allocation2] sm:$0xff]
    %v95 = vld [vmem:[#allocation2 + $0x8] sm:$0xff]
    %v96 = vld [vmem:[#allocation2 + $0x10] sm:$0xff]
    %v97 = vld [vmem:[#allocation2 + $0x18] sm:$0xff]
    %v98 = vpack.c.bf16 %v96, %v94
    %v99 = vpack.c.bf16 %v97, %v95
    %v100 = vld [vmem:[#allocation5] sm:$0xff]
    %v101 = vld [vmem:[#allocation5 + $0x8] sm:$0xf]
    %v102 = vld [vmem:[#allocation5 + $0xc] sm:$0xff]
    %v103 = vld [vmem:[#allocation5 + $0x14] sm:$0xf]
    %v104 = vld [vmem:[#allocation5 + $0x18] sm:$0xff]
    %v105 = vld [vmem:[#allocation5 + $0x20] sm:$0xf]
    %v106 = vld [vmem:[#allocation5 + $0x24] sm:$0xff]
    %v107 = vld [vmem:[#allocation5 + $0x2c] sm:$0xf]
    %v108 = vld [vmem:[#allocation5 + $0x30] sm:$0xff]
    %v109 = vld [vmem:[#allocation5 + $0x38] sm:$0xf]
    %v110 = vld [vmem:[#allocation5 + $0x3c] sm:$0xff]
    %v111 = vld [vmem:[#allocation5 + $0x44] sm:$0xf]
    %v112 = vld [vmem:[#allocation5 + $0x48] sm:$0xff]
    %v113 = vld [vmem:[#allocation5 + $0x50] sm:$0xf]
    %v114 = vld [vmem:[#allocation5 + $0x54] sm:$0xff]
    %v115 = vld [vmem:[#allocation5 + $0x5c] sm:$0xf]
    %v116 = vld [vmem:[#allocation5 + $0x60] sm:$0xff]
    %v117 = vld [vmem:[#allocation5 + $0x68] sm:$0xf]
    %v118 = vld [vmem:[#allocation5 + $0x6c] sm:$0xff]
    %v119 = vld [vmem:[#allocation5 + $0x74] sm:$0xf]
    %v120 = vld [vmem:[#allocation5 + $0x78] sm:$0xff]
    %v121 = vld [vmem:[#allocation5 + $0x80] sm:$0xf]
    %v122 = vld [vmem:[#allocation5 + $0x84] sm:$0xff]
    %v123 = vld [vmem:[#allocation5 + $0x8c] sm:$0xf]
    %v124 = vld [vmem:[#allocation5 + $0x90] sm:$0xff]
    %v125 = vld [vmem:[#allocation5 + $0x98] sm:$0xf]
    %v126 = vld [vmem:[#allocation5 + $0x9c] sm:$0xff]
    %v127 = vld [vmem:[#allocation5 + $0xa4] sm:$0xf]
    %v128 = vld [vmem:[#allocation5 + $0xa8] sm:$0xff]
    %v129 = vld [vmem:[#allocation5 + $0xb0] sm:$0xf]
    %v130 = vld [vmem:[#allocation5 + $0xb4] sm:$0xff]
    %v131 = vld [vmem:[#allocation5 + $0xbc] sm:$0xf]
    %v132 = vld [vmem:[#allocation5 + $0xc0] sm:$0xff]
    %v133 = vld [vmem:[#allocation5 + $0xc8] sm:$0xf]
    %v134 = vld [vmem:[#allocation5 + $0xcc] sm:$0xff]
    %v135 = vld [vmem:[#allocation5 + $0xd4] sm:$0xf]
    %v136 = vld [vmem:[#allocation5 + $0xd8] sm:$0xff]
    %v137 = vld [vmem:[#allocation5 + $0xe0] sm:$0xf]
    %v138 = vld [vmem:[#allocation5 + $0xe4] sm:$0xff]
    %v139 = vld [vmem:[#allocation5 + $0xec] sm:$0xf]
    %v140 = vld [vmem:[#allocation5 + $0xf0] sm:$0xff]
    %v141 = vld [vmem:[#allocation5 + $0xf8] sm:$0xf]
    %v142 = vld [vmem:[#allocation5 + $0xfc] sm:$0xff]
    %v143 = vld [vmem:[#allocation5 + $0x104] sm:$0xf]
    %v144 = vld [vmem:[#allocation5 + $0x108] sm:$0xff]
    %v145 = vld [vmem:[#allocation5 + $0x110] sm:$0xf]
    %v146 = vld [vmem:[#allocation5 + $0x114] sm:$0xff]
    %v147 = vld [vmem:[#allocation5 + $0x11c] sm:$0xf]
    %v148 = vld [vmem:[#allocation5 + $0x120] sm:$0xff]
    %v149 = vld [vmem:[#allocation5 + $0x128] sm:$0xf]
    %v150 = vld [vmem:[#allocation5 + $0x12c] sm:$0xff]
    %v151 = vld [vmem:[#allocation5 + $0x134] sm:$0xf]
    %v152 = vld [vmem:[#allocation5 + $0x138] sm:$0xff]
    %v153 = vld [vmem:[#allocation5 + $0x140] sm:$0xf]
    %v154 = vld [vmem:[#allocation5 + $0x144] sm:$0xff]
    %v155 = vld [vmem:[#allocation5 + $0x14c] sm:$0xf]
    %v156 = vld [vmem:[#allocation5 + $0x150] sm:$0xff]
    %v157 = vld [vmem:[#allocation5 + $0x158] sm:$0xf]
    %v158 = vld [vmem:[#allocation5 + $0x15c] sm:$0xff]
    %v159 = vld [vmem:[#allocation5 + $0x164] sm:$0xf]
    %v160 = vld [vmem:[#allocation5 + $0x168] sm:$0xff]
    %v161 = vld [vmem:[#allocation5 + $0x170] sm:$0xf]
    %v162 = vld [vmem:[#allocation5 + $0x174] sm:$0xff]
    %v163 = vld [vmem:[#allocation5 + $0x17c] sm:$0xf]
    %v228 = vunpack.c.l.b16 %v100
    %v229 = vunpack.c.h.b16 %v100
    %v230 = vunpack.c.l.b16 %v101
    %v231 = vunpack.c.l.b16 %v102
    %v232 = vunpack.c.h.b16 %v102
    %v233 = vunpack.c.l.b16 %v103
    %v234 = vunpack.c.l.b16 %v104
    %v235 = vunpack.c.h.b16 %v104
    %v236 = vunpack.c.l.b16 %v105
    %v237 = vunpack.c.l.b16 %v106
    %v238 = vunpack.c.h.b16 %v106
    %v239 = vunpack.c.l.b16 %v107
    %v240 = vunpack.c.l.b16 %v108
    %v241 = vunpack.c.h.b16 %v108
    %v242 = vunpack.c.l.b16 %v109
    %v243 = vunpack.c.l.b16 %v110
    %v244 = vunpack.c.h.b16 %v110
    %v245 = vunpack.c.l.b16 %v111
    %v246 = vunpack.c.l.b16 %v112
    %v247 = vunpack.c.h.b16 %v112
    %v248 = vunpack.c.l.b16 %v113
    %v249 = vunpack.c.l.b16 %v114
    %v250 = vunpack.c.h.b16 %v114
    %v251 = vunpack.c.l.b16 %v115
    %v252 = vunpack.c.l.b16 %v116
    %v253 = vunpack.c.h.b16 %v116
    %v254 = vunpack.c.l.b16 %v117
    %v255 = vunpack.c.l.b16 %v118
    %v256 = vunpack.c.h.b16 %v118
    %v257 = vunpack.c.l.b16 %v119
    %v258 = vunpack.c.l.b16 %v120
    %v259 = vunpack.c.h.b16 %v120
    %v260 = vunpack.c.l.b16 %v121
    %v261 = vunpack.c.l.b16 %v122
    %v262 = vunpack.c.h.b16 %v122
    %v263 = vunpack.c.l.b16 %v123
    %v264 = vunpack.c.l.b16 %v124
    %v265 = vunpack.c.h.b16 %v124
    %v266 = vunpack.c.l.b16 %v125
    %v267 = vunpack.c.l.b16 %v126
    %v268 = vunpack.c.h.b16 %v126
    %v269 = vunpack.c.l.b16 %v127
    %v270 = vunpack.c.l.b16 %v128
    %v271 = vunpack.c.h.b16 %v128
    %v272 = vunpack.c.l.b16 %v129
    %v273 = vunpack.c.l.b16 %v130
    %v274 = vunpack.c.h.b16 %v130
    %v275 = vunpack.c.l.b16 %v131
    %v276 = vunpack.c.l.b16 %v132
    %v277 = vunpack.c.h.b16 %v132
    %v278 = vunpack.c.l.b16 %v133
    %v279 = vunpack.c.l.b16 %v134
    %v280 = vunpack.c.h.b16 %v134
    %v281 = vunpack.c.l.b16 %v135
    %v282 = vunpack.c.l.b16 %v136
    %v283 = vunpack.c.h.b16 %v136
    %v284 = vunpack.c.l.b16 %v137
    %v285 = vunpack.c.l.b16 %v138
    %v286 = vunpack.c.h.b16 %v138
    %v287 = vunpack.c.l.b16 %v139
    %v288 = vunpack.c.l.b16 %v140
    %v289 = vunpack.c.h.b16 %v140
    %v290 = vunpack.c.l.b16 %v141
    %v291 = vunpack.c.l.b16 %v142
    %v292 = vunpack.c.h.b16 %v142
    %v293 = vunpack.c.l.b16 %v143
    %v294 = vunpack.c.l.b16 %v144
    %v295 = vunpack.c.h.b16 %v144
    %v296 = vunpack.c.l.b16 %v145
    %v297 = vunpack.c.l.b16 %v146
    %v298 = vunpack.c.h.b16 %v146
    %v299 = vunpack.c.l.b16 %v147
    %v300 = vunpack.c.l.b16 %v148
    %v301 = vunpack.c.h.b16 %v148
    %v302 = vunpack.c.l.b16 %v149
    %v303 = vunpack.c.l.b16 %v150
    %v304 = vunpack.c.h.b16 %v150
    %v305 = vunpack.c.l.b16 %v151
    %v306 = vunpack.c.l.b16 %v152
    %v307 = vunpack.c.h.b16 %v152
    %v308 = vunpack.c.l.b16 %v153
    %v309 = vunpack.c.l.b16 %v154
    %v310 = vunpack.c.h.b16 %v154
    %v311 = vunpack.c.l.b16 %v155
    %v312 = vunpack.c.l.b16 %v156
    %v313 = vunpack.c.h.b16 %v156
    %v314 = vunpack.c.l.b16 %v157
    %v315 = vunpack.c.l.b16 %v158
    %v316 = vunpack.c.h.b16 %v158
    %v317 = vunpack.c.l.b16 %v159
    %v318 = vunpack.c.l.b16 %v160
    %v319 = vunpack.c.h.b16 %v160
    %v320 = vunpack.c.l.b16 %v161
    %v321 = vunpack.c.l.b16 %v162
    %v322 = vunpack.c.h.b16 %v162
    %v323 = vunpack.c.l.b16 %v163
    %v324 = vpack.c.b16 %v231, %v228
    %v325 = vpack.c.b16 %v232, %v229
    %v326 = vpack.c.b16 %v233, %v230
    %v327 = vpack.c.b16 %v237, %v234
    %v328 = vpack.c.b16 %v238, %v235
    %v329 = vpack.c.b16 %v239, %v236
    %v330 = vpack.c.b16 %v243, %v240
    %v331 = vpack.c.b16 %v244, %v241
    %v332 = vpack.c.b16 %v245, %v242
    %v333 = vpack.c.b16 %v249, %v246
    %v334 = vpack.c.b16 %v250, %v247
    %v335 = vpack.c.b16 %v251, %v248
    %v336 = vpack.c.b16 %v255, %v252
    %v337 = vpack.c.b16 %v256, %v253
    %v338 = vpack.c.b16 %v257, %v254
    %v339 = vpack.c.b16 %v261, %v258
    %v340 = vpack.c.b16 %v262, %v259
    %v341 = vpack.c.b16 %v263, %v260
    %v342 = vpack.c.b16 %v267, %v264
    %v343 = vpack.c.b16 %v268, %v265
    %v344 = vpack.c.b16 %v269, %v266
    %v345 = vpack.c.b16 %v273, %v270
    %v346 = vpack.c.b16 %v274, %v271
    %v347 = vpack.c.b16 %v275, %v272
    %v348 = vpack.c.b16 %v279, %v276
    %v349 = vpack.c.b16 %v280, %v277
    %v350 = vpack.c.b16 %v281, %v278
    %v351 = vpack.c.b16 %v285, %v282
    %v352 = vpack.c.b16 %v286, %v283
    %v353 = vpack.c.b16 %v287, %v284
    %v354 = vpack.c.b16 %v291, %v288
    %v355 = vpack.c.b16 %v292, %v289
    %v356 = vpack.c.b16 %v293, %v290
    %v357 = vpack.c.b16 %v297, %v294
    %v358 = vpack.c.b16 %v298, %v295
    %v359 = vpack.c.b16 %v299, %v296
    %v360 = vpack.c.b16 %v303, %v300
    %v361 = vpack.c.b16 %v304, %v301
    %v362 = vpack.c.b16 %v305, %v302
    %v363 = vpack.c.b16 %v309, %v306
    %v364 = vpack.c.b16 %v310, %v307
    %v365 = vpack.c.b16 %v311, %v308
    %v366 = vpack.c.b16 %v315, %v312
    %v367 = vpack.c.b16 %v316, %v313
    %v368 = vpack.c.b16 %v317, %v314
    %v369 = vpack.c.b16 %v321, %v318
    %v370 = vpack.c.b16 %v322, %v319
    %v371 = vpack.c.b16 %v323, %v320
    %420 = vmatprep.subr.bf16.mxu0 %v325
    %421 = vmatpush1.bf16.msra.mxu0 %v324
    %422 = vmatprep.subr.bf16.mxu0 %v328
    %423 = vmatpush1.bf16.msra.mxu0 %v327
    %424 = vmatprep.subr.bf16.mxu0 %v331
    %425 = vmatpush1.bf16.msra.mxu0 %v330
    %426 = vmatprep.subr.bf16.mxu0 %v334
    %427 = vmatpush1.bf16.msra.mxu0 %v333
    %428 = vmatprep.subr.bf16.mxu0 %v337
    %429 = vmatpush1.bf16.msra.mxu0 %v336
    %430 = vmatprep.subr.bf16.mxu0 %v340
    %431 = vmatpush1.bf16.msra.mxu0 %v339
    %432 = vmatprep.subr.bf16.mxu0 %v343
    %433 = vmatpush1.bf16.msra.mxu0 %v342
    %434 = vmatprep.subr.bf16.mxu0 %v346
    %435 = vmatpush1.bf16.msra.mxu0 %v345
    %436 = vmatprep.subr.bf16.mxu0 %v349
    %437 = vmatpush1.bf16.msra.mxu0 %v348
    %438 = vmatprep.subr.bf16.mxu0 %v352
    %439 = vmatpush1.bf16.msra.mxu0 %v351
    %440 = vmatprep.subr.bf16.mxu0 %v355
    %441 = vmatpush1.bf16.msra.mxu0 %v354
    %442 = vmatprep.subr.bf16.mxu0 %v358
    %443 = vmatpush1.bf16.msra.mxu0 %v357
    %444 = vmatprep.subr.bf16.mxu0 %v361
    %445 = vmatpush1.bf16.msra.mxu0 %v360
    %446 = vmatprep.subr.bf16.mxu0 %v364
    %447 = vmatpush1.bf16.msra.mxu0 %v363
    %448 = vmatprep.subr.bf16.mxu0 %v367
    %449 = vmatpush1.bf16.msra.mxu0 %v366
    %450 = vmatprep.subr.bf16.mxu0 %v370
    %451 = vmatpush1.bf16.msra.mxu0 %v369
    %452 = vmatprep.mubr.bf16.mxu0 %v99
    %453 = vmatmul.mubr.bf16.gmra.mrb[0].mxu0 %v98
    %v454 = vpop.f32.mrb[0].mxu0
    %v455 = vadd.f32 0.0, %v454
    %v456 = vpop.f32.mrb[0].mxu0
    %v457 = vadd.f32 0.0, %v456
    %v458 = vpop.f32.mrb[0].mxu0
    %v459 = vadd.f32 0.0, %v458
    %v460 = vpop.f32.mrb[0].mxu0
    %v461 = vadd.f32 0.0, %v460
    %462 = vdwg.mxu0
    %463 = vmatprep.subr.bf16.mxu0 0
    %464 = vmatpush1.bf16.msra.mxu0 %v326
    %465 = vmatprep.subr.bf16.mxu0 0
    %466 = vmatpush1.bf16.msra.mxu0 %v329
    %467 = vmatprep.subr.bf16.mxu0 0
    %468 = vmatpush1.bf16.msra.mxu0 %v332
    %469 = vmatprep.subr.bf16.mxu0 0
    %470 = vmatpush1.bf16.msra.mxu0 %v335
    %471 = vmatprep.subr.bf16.mxu0 0
    %472 = vmatpush1.bf16.msra.mxu0 %v338
    %473 = vmatprep.subr.bf16.mxu0 0
    %474 = vmatpush1.bf16.msra.mxu0 %v341
    %475 = vmatprep.subr.bf16.mxu0 0
    %476 = vmatpush1.bf16.msra.mxu0 %v344
    %477 = vmatprep.subr.bf16.mxu0 0
    %478 = vmatpush1.bf16.msra.mxu0 %v347
    %479 = vmatprep.subr.bf16.mxu0 0
    %480 = vmatpush1.bf16.msra.mxu0 %v350
    %481 = vmatprep.subr.bf16.mxu0 0
    %482 = vmatpush1.bf16.msra.mxu0 %v353
    %483 = vmatprep.subr.bf16.mxu0 0
    %484 = vmatpush1.bf16.msra.mxu0 %v356
    %485 = vmatprep.subr.bf16.mxu0 0
    %486 = vmatpush1.bf16.msra.mxu0 %v359
    %487 = vmatprep.subr.bf16.mxu0 0
    %488 = vmatpush1.bf16.msra.mxu0 %v362
    %489 = vmatprep.subr.bf16.mxu0 0
    %490 = vmatpush1.bf16.msra.mxu0 %v365
    %491 = vmatprep.subr.bf16.mxu0 0
    %492 = vmatpush1.bf16.msra.mxu0 %v368
    %493 = vmatprep.subr.bf16.mxu0 0
    %494 = vmatpush1.bf16.msra.mxu0 %v371
    %495 = vmatprep.mubr.bf16.mxu0 %v99
    %496 = vmatmul.mubr.bf16.gmra.mrb[0].mxu0 %v98
    %v497 = vpop.f32.mrb[0].mxu0
    %v498 = vadd.f32 0.0, %v497
    %v499 = vpop.f32.mrb[0].mxu0
    %v500 = vpop.f32.mrb[0].mxu0
    %v501 = vadd.f32 0.0, %v500
    %v502 = vpop.f32.mrb[0].mxu0
    %503 = vdwg.mxu0
    %v504 = vld [vmem:[#allocation7] sm:$0xff]
    %v505 = vld [vmem:[#allocation7 + $0x8] sm:$0xff]
    %v506 = vld [vmem:[#allocation7 + $0x10] sm:$0xff]
    %v507 = vld [vmem:[#allocation7 + $0x18] sm:$0xff]
    %v508 = vld [vmem:[#allocation7 + $0x20] sm:$0xff]
    %v509 = vld [vmem:[#allocation7 + $0x28] sm:$0xff]
    %v510 = vmul.f32 %v455, %v504
    %v511 = vmul.f32 %v457, %v505
    %v512 = vmul.f32 %v498, %v506
    %v513 = vmul.f32 %v459, %v507
    %v514 = vmul.f32 %v461, %v508
    %v515 = vmul.f32 %v501, %v509
    %516 = vrot.lane.b32.xlu0 %v455, 127
    %v517 = vpop.permute.xlu0 %516
    %518 = vrot.lane.b32.xlu0 %v459, 127
    %v519 = vpop.permute.xlu0 %518
    %520 = vrot.lane.b32.xlu0 %v457, 127
    %v521 = vpop.permute.xlu0 %520
    %522 = vrot.lane.b32.xlu0 %v461, 127
    %v523 = vpop.permute.xlu0 %522
    %524 = vrot.lane.b32.xlu0 %v498, 127
    %v525 = vpop.permute.xlu0 %524
    %526 = vrot.lane.b32.xlu0 %v501, 127
    %v527 = vpop.permute.xlu0 %526
    %v528 = vlaneseq
    %v529 = vand.u32 %v528, 127
    %vm530 = vcmp.lt.s32.totalorder %v529, 127
    %v531 = vsel %vm530, %v521, %v525
    %v532 = vsel %vm530, %v523, %v527
    %v533 = vsel %vm530, %v517, %v521
    %v534 = vsel %vm530, %v519, %v523
    %v535 = vsel %vm530, %v525, %v517
    %v536 = vsel %vm530, %v527, %v519
    %v537 = vld [vmem:[#allocation8] sm:$0xff]
    %v538 = vld [vmem:[#allocation8 + $0x8] sm:$0xff]
    %v539 = vld [vmem:[#allocation8 + $0x10] sm:$0xff]
    %v540 = vld [vmem:[#allocation8 + $0x18] sm:$0xff]
    %v541 = vld [vmem:[#allocation8 + $0x20] sm:$0xff]
    %v542 = vld [vmem:[#allocation8 + $0x28] sm:$0xff]
    %v543 = vmul.f32 %v533, %v537
    %v544 = vmul.f32 %v531, %v538
    %v545 = vmul.f32 %v535, %v539
    %v546 = vmul.f32 %v534, %v540
    %v547 = vmul.f32 %v532, %v541
    %v548 = vmul.f32 %v536, %v542
    %v549 = vadd.f32 %v510, %v543
    %v550 = vadd.f32 %v511, %v544
    %v551 = vadd.f32 %v512, %v545
    %v552 = vadd.f32 %v513, %v546
    %v553 = vadd.f32 %v514, %v547
    %v554 = vadd.f32 %v515, %v548
    %555 = vrot.lane.b32.xlu0 %v455, 1
    %v556 = vpop.permute.xlu0 %555
    %557 = vrot.lane.b32.xlu0 %v459, 1
    %v558 = vpop.permute.xlu0 %557
    %559 = vrot.lane.b32.xlu0 %v457, 1
    %v560 = vpop.permute.xlu0 %559
    %561 = vrot.lane.b32.xlu0 %v461, 1
    %v562 = vpop.permute.xlu0 %561
    %563 = vrot.lane.b32.xlu0 %v498, 1
    %v564 = vpop.permute.xlu0 %563
    %565 = vrot.lane.b32.xlu0 %v501, 1
    %v566 = vpop.permute.xlu0 %565
    %vm567 = vcmp.lt.s32.totalorder %v529, 1
    %v568 = vsel %vm567, %v560, %v564
    %v569 = vsel %vm567, %v562, %v566
    %v570 = vsel %vm567, %v556, %v560
    %v571 = vsel %vm567, %v558, %v562
    %v572 = vsel %vm567, %v564, %v556
    %v573 = vsel %vm567, %v566, %v558
    %v574 = vld [vmem:[#allocation10] sm:$0xff]
    %v575 = vld [vmem:[#allocation10 + $0x8] sm:$0xff]
    %v576 = vld [vmem:[#allocation10 + $0x10] sm:$0xff]
    %v577 = vld [vmem:[#allocation10 + $0x18] sm:$0xff]
    %v578 = vld [vmem:[#allocation10 + $0x20] sm:$0xff]
    %v579 = vld [vmem:[#allocation10 + $0x28] sm:$0xff]
    %v580 = vmul.f32 %v572, %v574
    %v581 = vmul.f32 %v570, %v575
    %v582 = vmul.f32 %v568, %v576
    %v583 = vmul.f32 %v573, %v577
    %v584 = vmul.f32 %v571, %v578
    %v585 = vmul.f32 %v569, %v579
    %v586 = vadd.f32 %v549, %v580
    %v587 = vadd.f32 %v550, %v581
    %v588 = vadd.f32 %v551, %v582
    %v589 = vadd.f32 %v552, %v583
    %v590 = vadd.f32 %v553, %v584
    %v591 = vadd.f32 %v554, %v585
    %592 = vst [vmem:[#allocation11] sm:$0xff] %v586
    %593 = vst [vmem:[#allocation11 + $0x8] sm:$0xff] %v587
    %594 = vst [vmem:[#allocation11 + $0x10] sm:$0xff] %v589
    %595 = vst [vmem:[#allocation11 + $0x18] sm:$0xff] %v590
    %vm596 = vcmask 523264
    %597 = vst.msk [vmem:[#allocation12] sm:$0xff] %vm596, %v588
    %598 = vst.msk [vmem:[#allocation12 + $0x8] sm:$0xff] %vm596, %v591
    %601 = vrot.lane.b32.xlu0 %v498, 64
    %v602 = vpop.permute.xlu0 %601
    %603 = vrot.lane.b32.xlu0 %v501, 64
    %v604 = vpop.permute.xlu0 %603
    %607 = vst.msk [vmem:[#allocation14] sm:$0xff] %vm596, %v602
    %608 = vst.msk [vmem:[#allocation14 + $0x8] sm:$0xff] %vm596, %v604
    // Predicated region
    $region42: #{tpu_custom_call.1} parent=1 // pred_check
      _
    $region43: #{tpu_custom_call.1} parent=1 // pred_check_branch
      %610 = sbr.rel (0) target = $region45
    $region44: #{tpu_custom_call.1} parent=1 // pred_region
      %s612 = ssub.s32 512, 512
      %613 = vsyncadd [#allocation4], %s612
      %s614 = sshll.u32 [#allocation11], 4
      %s615 = int_to_ptr.vmem [resolvable:$true] %s614
      %620 = dma.vmem_to_hbm [thread:$0]  %s615, 512, %s5, [#allocation4], 256, 256, 16
    $region45: #{tpu_custom_call.1} parent=1 // pred_fallthru
      _
    // Predicated region
    $region46: #{tpu_custom_call.1} parent=1 // pred_check
      _
    $region47: #{tpu_custom_call.1} parent=1 // pred_check_branch
      %622 = sbr.rel (0) target = $region49
    $region48: #{tpu_custom_call.1} parent=1 // pred_region
      %s624 = ssub.s32 256, 256
      %625 = vsyncadd [#allocation13], %s624
      %s626 = sshll.u32 [#allocation12], 4
      %s627 = int_to_ptr.vmem [resolvable:$true] %s626
      %632 = dma.vmem_to_hbm [thread:$0]  %s627, 256, %s6, [#allocation13], 128, 128, 8
    $region49: #{tpu_custom_call.1} parent=1 // pred_fallthru
      _
    // Predicated region
    $region50: #{tpu_custom_call.1} parent=1 // pred_check
      _
    $region51: #{tpu_custom_call.1} parent=1 // pred_check_branch
      %634 = sbr.rel (0) target = $region53
    $region52: #{tpu_custom_call.1} parent=1 // pred_region
      %s636 = ssub.s32 256, 256
      %637 = vsyncadd [#allocation13], %s636
      %s638 = sshll.u32 [#allocation14], 4
      %s639 = int_to_ptr.vmem [resolvable:$true] %s638
      %644 = dma.vmem_to_hbm [thread:$0]  %s639, 256, %s7, [#allocation13], 128, 128, 8
    $region53: #{tpu_custom_call.1} parent=1 // pred_fallthru
      _
    // Predicated region
    $region54: #{tpu_custom_call.1} parent=1 // pred_check
      _
    $region55: #{tpu_custom_call.1} parent=1 // pred_check_branch
      %646 = sbr.rel (0) target = $region57
    $region56: #{tpu_custom_call.1} parent=1 // pred_region
      %647 = dma.done [#allocation4], 512
    $region57: #{tpu_custom_call.1} parent=1 // pred_fallthru
      _
    // Predicated region
    $region58: #{tpu_custom_call.1} parent=1 // pred_check
      _
    $region59: #{tpu_custom_call.1} parent=1 // pred_check_branch
      %649 = sbr.rel (0) target = $region61
    $region60: #{tpu_custom_call.1} parent=1 // pred_region
      %650 = dma.done [#allocation13], 256
    $region61: #{tpu_custom_call.1} parent=1 // pred_fallthru
      _
    // Predicated region
    $region62: #{tpu_custom_call.1} parent=1 // pred_check
      _
    $region63: #{tpu_custom_call.1} parent=1 // pred_check_branch
      %652 = sbr.rel (0) target = $region65
    $region64: #{tpu_custom_call.1} parent=1 // pred_region
      %653 = dma.done [#allocation13], 256
    $region65: #{tpu_custom_call.1} parent=1 // pred_fallthru
      _
    %654 = vsyncpa [#allocation3], 1
    %655 = vsyncpa [#allocation6], 1
    %656 = vsyncpa [#allocation9], 1
    %657 = vsyncpa [#allocation4], 1
    %658 = vsyncpa [#allocation13], 1

</llo_original>
